<compile_context>
chip_gen: v7x
topology: tpu7x:2x2x1
jax: 0.10.0
libtpu: 0.0.40
codegen_flags: <defaults>
</compile_context>

<pallas_src>
import functools

import jax
import jax.numpy as jnp
from jax.experimental import pallas as pl
from jax.experimental.pallas import tpu as pltpu

_SUBLANE = 8  # vreg sublane width: batch-tile granularity


def _round_up(n, m):
    return ((n + m - 1) // m) * m


def _cdiv(a, b):
    return (a + b - 1) // b


def _forward_kernel(x_ref, w_ref, b_ref, o_ref):
    # x_ref: (TB, F) f32   w_ref: (F, C) bf16   b_ref: (1, C) f32   o_ref: (TB, C) f32
    x = x_ref[...].astype(jnp.bfloat16)            # in-kernel cast (no wrapper pass)
    logits = jnp.dot(x, w_ref[...],
                     preferred_element_type=jnp.float32) + b_ref[...]
    # Numerically stable softmax over the real class axis only, f32 math
    # (safe on v5e which lacks a bf16 VPU/EUP path).
    m = jnp.max(logits, axis=-1, keepdims=True)
    e = jnp.exp(logits - m)
    denom = jnp.sum(e, axis=-1, keepdims=True)
    o_ref[...] = e / denom                          # exact normalization


@functools.partial(jax.jit, static_argnames=("tb_max",))
def ml_pipeline_forward(x, w_bf16, b, *, tb_max=1024):
    """Forward of the concrete MLPipeline: softmax(x @ W + b), batch-tiled."""
    B, F = x.shape
    Fw, C = w_bf16.shape
    assert F == Fw and b.shape == (1, C)

    # Batch tile selection: minimize pad waste; keep >= 2 grid steps when the
    # batch allows so v7x's two TensorCores both get work.
    ntiles = max(_cdiv(B, tb_max), 2 if B >= 2 * _SUBLANE else 1)
    TB = _round_up(_cdiv(B, ntiles), _SUBLANE)
    Bp = ntiles * TB

    # Only the tiny batch remainder (< ntiles * 8 rows) is padded; x keeps its
    # original dtype and feature width.
    xb = x if Bp == B else jnp.zeros((Bp, F), x.dtype).at[:B].set(x)

    out = pl.pallas_call(
        _forward_kernel,
        out_shape=jax.ShapeDtypeStruct((Bp, C), jnp.float32),
        grid=(ntiles,),
        in_specs=[
            pl.BlockSpec((TB, F), lambda i: (i, 0)),   # x: streamed per tile
            pl.BlockSpec((Fw, C), lambda i: (0, 0)),   # W: VMEM-resident (bf16)
            pl.BlockSpec((1, C), lambda i: (0, 0)),    # b: VMEM-resident (f32)
        ],
        out_specs=pl.BlockSpec((TB, C), lambda i: (i, 0)),
        compiler_params=pltpu.CompilerParams(
            dimension_semantics=("parallel",),          # megacore on v7x
            vmem_limit_bytes=32 * 1024 * 1024,          # headroom on all gens
        ),
    )(xb, w_bf16, b)

    return out if Bp == B else out[:B]


class MLPipelineJax:
    """Mirror of the PyTorch MLPipeline, with the forward hot path in Pallas."""

    def __init__(self, in_features=32, num_classes=16, epochs=10, lr=0.025,
                 key=None):
        self.epochs = epochs
        self.lr = lr
        key = jax.random.PRNGKey(0) if key is None else key
        kw, kb = jax.random.split(key)
        self.w = (jax.random.normal(kw, (in_features, num_classes),
                                    dtype=jnp.float32) * 0.05)
        self.b = (jax.random.normal(kb, (1, num_classes),
                                    dtype=jnp.float32) * 0.01)
        # Hoisted cast: W is fed to the MXU as bf16; done once, not per call.
        self.w_bf16 = self.w.astype(jnp.bfloat16)

    def forward(self, x):
        return ml_pipeline_forward(x, self.w_bf16, self.b)

    def metrics(self, y_score, y_truth):
        # Cross-entropy + accuracy (host-side glue, plain JAX).
        # TODO(synk): fuse into the kernel (emit log-probs / logsumexp) for
        # better numerics and to avoid re-reading the softmax from HBM.
        eps = 1e-9
        nll = -jnp.mean(jnp.log(
            jnp.take_along_axis(y_score, y_truth[:, None], axis=1) + eps))
        acc = jnp.mean((jnp.argmax(y_score, axis=1) == y_truth)
                       .astype(jnp.float32))
        return nll, acc


def _reference(x, w, b):
    # Same bf16-operand / f32-accumulate numerics as the kernel.
    xr = x.astype(jnp.bfloat16).astype(jnp.float32)
    wr = w.astype(jnp.bfloat16).astype(jnp.float32)
    return jax.nn.softmax(xr @ wr + b, axis=-1)


if __name__ == "__main__":
    key = jax.random.PRNGKey(0)
    kx, ky, kp, kx2 = jax.random.split(key, 4)

    batch, in_features, num_classes = 8, 32, 16
    x = jax.random.normal(kx, (batch, in_features), dtype=jnp.float32)
    y = jax.random.randint(ky, (batch,), 0, num_classes)

    model = MLPipelineJax(in_features=in_features, num_classes=num_classes,
                          key=kp)

    # --- small single-tile forward ---
    y_score = jax.block_until_ready(model.forward(x))
    ref = _reference(x, model.w, model.b)
    assert y_score.shape == (batch, num_classes)
    assert jnp.allclose(jnp.sum(y_score, axis=-1), 1.0, atol=2e-3)
    assert jnp.allclose(y_score, ref, atol=2e-3)

    loss, acc = model.metrics(y_score, y)
    jax.block_until_ready((loss, acc))

    # --- larger batch exercising the tiled grid (2 tiles, padded remainder) ---
    x2 = jax.random.normal(kx2, (300, in_features), dtype=jnp.float32)
    y2_score = jax.block_until_ready(model.forward(x2))
    ref2 = _reference(x2, model.w, model.b)
    assert y2_score.shape == (300, num_classes)
    assert jnp.allclose(jnp.sum(y2_score, axis=-1), 1.0, atol=2e-3)
    assert jnp.allclose(y2_score, ref2, atol=2e-3)

    print("KERNEL_OK")
</pallas_src>

<mosaic_0001>
module attributes {stable_mosaic.version = 11 : i64} {
  func.func @_forward_kernel(%arg0: i32, %arg1: memref<8x32xf32, #tpu.memory_space<vmem>>, %arg2: memref<32x16xbf16, #tpu.memory_space<vmem>>, %arg3: memref<1x16xf32, #tpu.memory_space<vmem>>, %arg4: memref<8x16xf32, #tpu.memory_space<vmem>>) attributes {dimension_semantics = [#tpu.dimension_semantics<parallel>], iteration_bounds = array<i64: 1>, scalar_prefetch = 0 : i64, scratch_operands = 0 : i64, tpu.core_type = #tpu.core_type<tc>, window_params = [{transform_indices = @transform_0, window_bounds = array<i64: 8, 32>}, {pipeline_mode = #tpu.pipeline_mode<synchronous>, transform_indices = @transform_1, window_bounds = array<i64: 32, 16>}, {pipeline_mode = #tpu.pipeline_mode<synchronous>, transform_indices = @transform_2, window_bounds = array<i64: 1, 16>}, {transform_indices = @transform_3, window_bounds = array<i64: 8, 16>}]} {
    %c0 = arith.constant 0 : index
    %c0_0 = arith.constant 0 : index
    %0 = vector.load %arg1[%c0, %c0_0] : memref<8x32xf32, #tpu.memory_space<vmem>>, vector<8x32xf32>
    %1 = arith.truncf %0 : vector<8x32xf32> to vector<8x32xbf16>
    %c0_1 = arith.constant 0 : index
    %c0_2 = arith.constant 0 : index
    %2 = vector.load %arg2[%c0_1, %c0_2] : memref<32x16xbf16, #tpu.memory_space<vmem>>, vector<32x16xbf16>
    %cst = arith.constant dense<0.000000e+00> : vector<8x16xf32>
    %3 = tpu.matmul %1, %2, %cst {dimension_numbers = #tpu.dot_dimension_numbers<[1], [0], [0], [1], [0, 0, 1, 1], [], []>} : vector<8x32xbf16>, vector<32x16xbf16>, vector<8x16xf32> -> vector<8x16xf32>
    %c0_3 = arith.constant 0 : index
    %c0_4 = arith.constant 0 : index
    %4 = vector.load %arg3[%c0_3, %c0_4] : memref<1x16xf32, #tpu.memory_space<vmem>>, vector<1x16xf32>
    %5 = vector.broadcast %4 : vector<1x16xf32> to vector<8x16xf32>
    %6 = arith.addf %3, %5 : vector<8x16xf32>
    %cst_5 = arith.constant dense<0xFF800000> : vector<8xf32>
    %7 = vector.multi_reduction <maximumf>, %6, %cst_5 [1] : vector<8x16xf32> to vector<8xf32>
    %8 = vector.shape_cast %7 : vector<8xf32> to vector<8x1xf32>
    %9 = vector.broadcast %8 : vector<8x1xf32> to vector<8x16xf32>
    %10 = arith.subf %6, %9 : vector<8x16xf32>
    %11 = math.exp %10 : vector<8x16xf32>
    %cst_6 = arith.constant dense<0.000000e+00> : vector<8xf32>
    %12 = vector.multi_reduction <add>, %11, %cst_6 [1] : vector<8x16xf32> to vector<8xf32>
    %13 = vector.shape_cast %12 : vector<8xf32> to vector<8x1xf32>
    %14 = vector.broadcast %13 : vector<8x1xf32> to vector<8x16xf32>
    %15 = arith.divf %11, %14 : vector<8x16xf32>
    %c0_7 = arith.constant 0 : index
    %c0_8 = arith.constant 0 : index
    %16 = vector.load %arg4[%c0_7, %c0_8] : memref<8x16xf32, #tpu.memory_space<vmem>>, vector<8x16xf32>
    tpu.vector_store %arg4[%c0_7, %c0_8], %15 {strides = array<i32>} : memref<8x16xf32, #tpu.memory_space<vmem>>, vector<8x16xf32>,
    return
  }
  func.func @transform_0(%arg0: i32) -> (i32, i32) {
    %c0_i32 = arith.constant 0 : i32
    %c0_i32_0 = arith.constant 0 : i32
    return %arg0, %c0_i32 : i32, i32
  }
  func.func @transform_1(%arg0: i32) -> (i32, i32) {
    %c0_i32 = arith.constant 0 : i32
    %c0_i32_0 = arith.constant 0 : i32
    %c0_i32_1 = arith.constant 0 : i32
    return %c0_i32, %c0_i32_0 : i32, i32
  }
  func.func @transform_2(%arg0: i32) -> (i32, i32) {
    %c0_i32 = arith.constant 0 : i32
    %c0_i32_0 = arith.constant 0 : i32
    %c0_i32_1 = arith.constant 0 : i32
    return %c0_i32, %c0_i32_0 : i32, i32
  }
  func.func @transform_3(%arg0: i32) -> (i32, i32) {
    %c0_i32 = arith.constant 0 : i32
    %c0_i32_0 = arith.constant 0 : i32
    return %arg0, %c0_i32 : i32, i32
  }
}

</mosaic_0001>

<llo_original>
// kernel: ml_pipeline_forward.1
$region0: #{ml_pipeline_forward.1}
  #allocation0 [shape = 'u32[]', space=smem, size = 0x4, offset = 0x4, fixed_abs, tag = 'smem constant byte address 0x4 - core index']
  #allocation1 [shape = 'u32[144,128]{1,0:T(1,128)}', space=vmem, size = 0x12000, scoped, tag = 'internal scratch']
  %s0 = inlined_call_operand.vmem [shape: f32[8,32], index: 0, kind: input, shape index: {}]
  %s1 = inlined_call_operand.vmem [shape: bf16[32,16], index: 1, kind: input, shape index: {}]
  %s2 = inlined_call_operand.vmem [shape: f32[1,16], index: 2, kind: input, shape index: {}]
  %s3 = inlined_call_operand.hbm [shape: f32[8,16], index: 3, kind: output, shape index: {}]
  %s4 = sld [smem:[#allocation0]]
  $region22: #{ml_pipeline_forward.1} parent=0
    _
  %s6 = ssub.s32 1, %s4
  %s7 = scalar_select 0, %s6, %s4
  $region1: #{ml_pipeline_forward.1} parent=0
    #allocation2 [shape = 'u8[4096]{0}', space=vmem, size = 0x1000, scoped, tag = 'output window, operand 0, single buffered']
    #allocation3 [shape = 's32[1]{0}', space=sflag, size = 0x4, scoped, tag = 'scoped memory for ml_pipeline_forward.1']
    %8 = vsyncpa [#allocation3], 0
    // Predicated region
    $region2: #{ml_pipeline_forward.1} parent=1 // pred_check
      _
    $region3: #{ml_pipeline_forward.1} parent=1 // pred_check_branch
      %10 = sbr.rel (0) target = $region5
    $region4: #{ml_pipeline_forward.1} parent=1 // pred_region
      _
    $region5: #{ml_pipeline_forward.1} parent=1 // pred_fallthru
      _
    // Predicated region
    $region6: #{ml_pipeline_forward.1} parent=1 // pred_check
      _
    $region7: #{ml_pipeline_forward.1} parent=1 // pred_check_branch
      %12 = sbr.rel (0) target = $region9
    $region8: #{ml_pipeline_forward.1} parent=1 // pred_region
      _
    $region9: #{ml_pipeline_forward.1} parent=1 // pred_fallthru
      _
    // Predicated region
    $region10: #{ml_pipeline_forward.1} parent=1 // pred_check
      _
    $region11: #{ml_pipeline_forward.1} parent=1 // pred_check_branch
      %14 = sbr.rel (0) target = $region13
    $region12: #{ml_pipeline_forward.1} parent=1 // pred_region
      _
    $region13: #{ml_pipeline_forward.1} parent=1 // pred_fallthru
      _
    %v16 = vld [vmem:[%s0] sm:$0xff]
    %v17 = vpack.c.bf16 %v16, %v16
    %v18 = vld [vmem:[%s1] sm:$0xf]
    %v19 = vld [vmem:[%s1 + $0x4] sm:$0xf]
    %v20 = vld [vmem:[%s1 + $0x8] sm:$0xf]
    %v21 = vld [vmem:[%s1 + $0xc] sm:$0xf]
    %v22 = vld [vmem:[%s2] sm:$0x1]
    %v24 = vlaneseq
    %v25 = vshrl.u32 %v24, 7
    %v26 = vsub.s32 0, %v25
    %v27 = vrot.slane %v22, %v26
    %v33 = vunpack.c.l.b16 %v18
    %v34 = vunpack.c.l.b16 %v19
    %v35 = vunpack.c.l.b16 %v20
    %v36 = vunpack.c.l.b16 %v21
    %v37 = vpack.c.b16 %v34, %v33
    %v38 = vpack.c.b16 %v36, %v35
    %vm41 = vcmask 261120
    %v43 = vsel %vm41, %v17, 0
    %45 = vmatprep.subr.bf16.mxu0 0
    %46 = vmatpush1.bf16.msra.mxu0 %v37
    %47 = vmatprep.subr.bf16.mxu0 0
    %48 = vmatpush1.bf16.msra.mxu0 %v38
    %49 = vmatprep.subr.bf16.mxu0 0
    %50 = vmatpush1.bf16.msra.mxu0 0
    %51 = vmatprep.subr.bf16.mxu0 0
    %52 = vmatpush1.bf16.msra.mxu0 0
    %53 = vmatprep.subr.bf16.mxu0 0
    %54 = vmatpush1.bf16.msra.mxu0 0
    %55 = vmatprep.subr.bf16.mxu0 0
    %56 = vmatpush1.bf16.msra.mxu0 0
    %57 = vmatprep.subr.bf16.mxu0 0
    %58 = vmatpush1.bf16.msra.mxu0 0
    %59 = vmatprep.subr.bf16.mxu0 0
    %60 = vmatpush1.bf16.msra.mxu0 0
    %61 = vmatprep.subr.bf16.mxu0 0
    %62 = vmatpush1.bf16.msra.mxu0 0
    %63 = vmatprep.subr.bf16.mxu0 0
    %64 = vmatpush1.bf16.msra.mxu0 0
    %65 = vmatprep.subr.bf16.mxu0 0
    %66 = vmatpush1.bf16.msra.mxu0 0
    %67 = vmatprep.subr.bf16.mxu0 0
    %68 = vmatpush1.bf16.msra.mxu0 0
    %69 = vmatprep.subr.bf16.mxu0 0
    %70 = vmatpush1.bf16.msra.mxu0 0
    %71 = vmatprep.subr.bf16.mxu0 0
    %72 = vmatpush1.bf16.msra.mxu0 0
    %73 = vmatprep.subr.bf16.mxu0 0
    %74 = vmatpush1.bf16.msra.mxu0 0
    %75 = vmatprep.subr.bf16.mxu0 0
    %76 = vmatpush1.bf16.msra.mxu0 0
    %77 = vmatprep.mubr.bf16.mxu0 0
    %78 = vmatmul.mubr.bf16.gmra.mrb[0].mxu0 %v43
    %v79 = vpop.f32.mrb[0].mxu0
    %v80 = vadd.f32 %v27, %v79
    %v81 = vpop.f32.mrb[0].mxu0
    %v82 = vpop.f32.mrb[0].mxu0
    %v83 = vpop.f32.mrb[0].mxu0
    %84 = vdwg.mxu0
    %vm85 = vcmask 130048
    %v86 = vsel %vm85, %v80, -inf
    %87 = vmax.xlane.f32.xlu0 %v86
    %v88 = vpop.xlane.xlu0 %87
    %v89 = vsub.f32 %v80, %v88
    %v90 = vmul.f32 %v89, 1.442695
    %v91 = vpow.pop %v90
    %v92 = vsel %vm85, %v91, 0.0
    %93 = vadd.xlane.f32.xlu0 %v92
    %v94 = vpop.xlane.xlu0 %93
    %v95 = vrcp.pop %v94
    %v96 = vmul.f32 %v91, %v95
    %97 = vst.msk [vmem:[#allocation2] sm:$0xff] %vm85, %v96
    // Predicated region
    $region14: #{ml_pipeline_forward.1} parent=1 // pred_check
      _
    $region15: #{ml_pipeline_forward.1} parent=1 // pred_check_branch
      %99 = sbr.rel (0) target = $region17
    $region16: #{ml_pipeline_forward.1} parent=1 // pred_region
      %s101 = ssub.s32 128, 128
      %102 = vsyncadd [#allocation3], %s101
      %s104 = sshll.u32 [#allocation2], 4
      %s105 = int_to_ptr.vmem [resolvable:$true] %s104
      %107 = dma.vmem_to_hbm [thread:$0]  %s105, 128, %s3, [#allocation3]
    $region17: #{ml_pipeline_forward.1} parent=1 // pred_fallthru
      _
    // Predicated region
    $region18: #{ml_pipeline_forward.1} parent=1 // pred_check
      _
    $region19: #{ml_pipeline_forward.1} parent=1 // pred_check_branch
      %109 = sbr.rel (0) target = $region21
    $region20: #{ml_pipeline_forward.1} parent=1 // pred_region
      %110 = dma.done [#allocation3], 128
    $region21: #{ml_pipeline_forward.1} parent=1 // pred_fallthru
      _
    %111 = vsyncpa [#allocation3], 1

</llo_original>
